<compile_context>
chip_gen: v7x
topology: tpu7x:2x2x1
jax: 0.10.0
libtpu: 0.0.40
codegen_flags: <defaults>
</compile_context>

<pallas_src>
import math
import functools

import jax
import jax.numpy as jnp
from jax.experimental import pallas as pl
from jax.experimental.pallas import tpu as pltpu


def _attention_kernel(x_ref, wq_ref, bq_ref, wk_ref, bk_ref, wv_ref, bv_ref,
                      wp_ref, bp_ref, o_ref, acc_ref, *, head_size: int,
                      seq: int, batch_block: int, compute_dtype):
    """One grid step = (batch slab i, head h).

    x_ref   : (rows, C) row slab, compute_dtype (resident across the h axis)
    wq/wk/wv: (1, C, hs) this head's projection weights, compute_dtype
    bq/bk/bv: (1, 1, hs) this head's projection biases, f32
    wp_ref  : (1, hs, C) this head's slice of the output projection
    bp_ref  : (1, C) output-projection bias (resident)
    o_ref   : (rows, C) output slab (resident accumulator target)
    acc_ref : (rows, C) f32 VMEM accumulator scratch
    """
    h = pl.program_id(1)
    rows = batch_block * seq
    scale = 1.0 / math.sqrt(head_size)

    @pl.when(h == 0)
    def _init():
        acc_ref[...] = jnp.zeros_like(acc_ref)

    x = x_ref[...]                                        # (rows, C)

    # Per-head Q/K/V: lane-aligned (rows, hs) outputs, f32 accumulation on MXU.
    q = jnp.dot(x, wq_ref[0], preferred_element_type=jnp.float32) + bq_ref[0]
    k = jnp.dot(x, wk_ref[0], preferred_element_type=jnp.float32) + bk_ref[0]
    v = jnp.dot(x, wv_ref[0], preferred_element_type=jnp.float32) + bv_ref[0]
    q = q * scale                       # fold 1/sqrt(hs) into q once (rows*hs mults)

    # Batched (over batch_block) attention: leading-batch 3-D einsums, last-dim
    # contraction on both operands (no explicit transpose).
    q3 = q.reshape(batch_block, seq, head_size).astype(compute_dtype)
    k3 = k.reshape(batch_block, seq, head_size).astype(compute_dtype)
    v3 = v.reshape(batch_block, seq, head_size).astype(compute_dtype)

    s = jnp.einsum("bqd,bkd->bqk", q3, k3,
                   preferred_element_type=jnp.float32)    # (bb, T, T)

    # Numerically stable softmax over keys (non-causal: no mask).
    s_max = jnp.max(s, axis=-1, keepdims=True)
    p = jnp.exp(s - s_max)
    denom = jnp.sum(p, axis=-1, keepdims=True)
    p = p * pl.reciprocal(denom, approx=True)             # EUP vrcp

    y = jnp.einsum("bqk,bkd->bqd", p.astype(compute_dtype), v3,
                   preferred_element_type=jnp.float32)    # (bb, T, hs)

    # Fused output projection: accumulate this head's (rows, C) contribution.
    y2 = y.reshape(rows, head_size).astype(compute_dtype)
    acc_ref[...] += jnp.dot(y2, wp_ref[0], preferred_element_type=jnp.float32)

    @pl.when(h == pl.num_programs(1) - 1)
    def _finalize():
        o_ref[...] = (acc_ref[...] + bp_ref[...]).astype(o_ref.dtype)


def denoising_self_attention(x, w_qkv, b_qkv, w_proj, b_proj, *, n_head: int,
                             batch_block: int | None = None,
                             compute_dtype=jnp.bfloat16,
                             vmem_limit_bytes: int | None = None):
    """x: (B, T, C); w_qkv: (C, 3C); b_qkv: (3C,); w_proj: (C, C); b_proj: (C,).

    Weights follow the (in_features, out_features) convention, i.e. y = x@W+b.

    batch_block: batch elements per grid step along the parallel axis.
      Default max(1, B // 2) keeps the parallel axis >= 2 steps (required to
      use both v7x TensorCores; also gives DMA/compute overlap on v5e/v6e).
    compute_dtype: dtype fed to the MXU (bf16 default; accumulation stays f32).
    vmem_limit_bytes: raise this when scaling to realistic B/T/C (v6e/v7x note
      in the perf review); left unset at toy shapes.
    """
    B, T, C = x.shape
    assert C % n_head == 0
    hs = C // n_head
    if batch_block is None:
        batch_block = max(1, B // 2)
    assert B % batch_block == 0
    rows = batch_block * T

    # Split fused QKV into per-head, lane-aligned weight stacks (wrapper-side,
    # plain XLA): w_*[h] is (C, hs), b_*[h] is (1, hs), w_p[h] is (hs, C).
    w_q = w_qkv[:, 0 * C:1 * C].reshape(C, n_head, hs).transpose(1, 0, 2)
    w_k = w_qkv[:, 1 * C:2 * C].reshape(C, n_head, hs).transpose(1, 0, 2)
    w_v = w_qkv[:, 2 * C:3 * C].reshape(C, n_head, hs).transpose(1, 0, 2)
    b_q = b_qkv[0 * C:1 * C].reshape(n_head, 1, hs)
    b_k = b_qkv[1 * C:2 * C].reshape(n_head, 1, hs)
    b_v = b_qkv[2 * C:3 * C].reshape(n_head, 1, hs)
    w_p = w_proj.reshape(n_head, hs, C)
    b_p = b_proj.reshape(1, C)

    # bf16 MXU operands (halves x/weight HBM->VMEM bytes); biases stay f32.
    x2 = x.reshape(B * T, C).astype(compute_dtype)
    w_q = w_q.astype(compute_dtype)
    w_k = w_k.astype(compute_dtype)
    w_v = w_v.astype(compute_dtype)
    w_p = w_p.astype(compute_dtype)

    kernel = functools.partial(_attention_kernel, head_size=hs, seq=T,
                               batch_block=batch_block,
                               compute_dtype=compute_dtype)

    cp_kwargs = dict(dimension_semantics=("parallel", "arbitrary"))
    if vmem_limit_bytes is not None:
        cp_kwargs["vmem_limit_bytes"] = int(vmem_limit_bytes)

    out2 = pl.pallas_call(
        kernel,
        out_shape=jax.ShapeDtypeStruct((B * T, C), x.dtype),
        grid_spec=pltpu.PrefetchScalarGridSpec(
            num_scalar_prefetch=0,
            grid=(B // batch_block, n_head),
            in_specs=[
                pl.BlockSpec((rows, C), lambda i, h: (i, 0)),      # x slab (resident over h)
                pl.BlockSpec((1, C, hs), lambda i, h: (h, 0, 0)),  # w_q[h]
                pl.BlockSpec((1, 1, hs), lambda i, h: (h, 0, 0)),  # b_q[h]
                pl.BlockSpec((1, C, hs), lambda i, h: (h, 0, 0)),  # w_k[h]
                pl.BlockSpec((1, 1, hs), lambda i, h: (h, 0, 0)),  # b_k[h]
                pl.BlockSpec((1, C, hs), lambda i, h: (h, 0, 0)),  # w_v[h]
                pl.BlockSpec((1, 1, hs), lambda i, h: (h, 0, 0)),  # b_v[h]
                pl.BlockSpec((1, hs, C), lambda i, h: (h, 0, 0)),  # w_proj[h]
                pl.BlockSpec((1, C), lambda i, h: (0, 0)),         # b_proj (resident)
            ],
            out_specs=pl.BlockSpec((rows, C), lambda i, h: (i, 0)),
            scratch_shapes=[pltpu.VMEM((rows, C), jnp.float32)],   # projection accumulator
        ),
        compiler_params=pltpu.CompilerParams(**cp_kwargs),
    )(x2, w_q, b_q, w_k, b_k, w_v, b_v, w_p, b_p)

    return out2.reshape(B, T, C)


def reference_attention(x, w_qkv, b_qkv, w_proj, b_proj, *, n_head: int):
    """Plain-JAX f32 reference matching the PyTorch forward semantics."""
    B, T, C = x.shape
    hs = C // n_head
    qkv = jnp.einsum("btc,cd->btd", x, w_qkv) + b_qkv
    q, k, v = qkv[..., :C], qkv[..., C:2 * C], qkv[..., 2 * C:]

    def split_heads(t):  # (B, T, C) -> (B, H, T, hs)
        return t.reshape(B, T, n_head, hs).transpose(0, 2, 1, 3)

    q, k, v = split_heads(q), split_heads(k), split_heads(v)
    s = jnp.einsum("bhqd,bhkd->bhqk", q, k) / math.sqrt(hs)
    p = jax.nn.softmax(s, axis=-1)
    y = jnp.einsum("bhqk,bhkd->bhqd", p, v)
    y = y.transpose(0, 2, 1, 3).reshape(B, T, C)
    return jnp.einsum("btc,cd->btd", y, w_proj) + b_proj


if __name__ == "__main__":
    # Small config consistent with the module: n_embed % n_head == 0.
    B, T = 2, 8
    n_embed, n_head = 32, 4

    key = jax.random.PRNGKey(0)
    kx, kw1, kb1, kw2, kb2 = jax.random.split(key, 5)

    x = jax.random.normal(kx, (B, T, n_embed), dtype=jnp.float32)
    # PyTorch Linear stores (out, in); weights are kept pre-transposed as
    # (in, out) so the kernel computes x @ W + b.
    w_qkv = jax.random.normal(kw1, (n_embed, 3 * n_embed), dtype=jnp.float32) * 0.02
    b_qkv = jax.random.normal(kb1, (3 * n_embed,), dtype=jnp.float32) * 0.02
    w_proj = jax.random.normal(kw2, (n_embed, n_embed), dtype=jnp.float32) * 0.02
    b_proj = jax.random.normal(kb2, (n_embed,), dtype=jnp.float32) * 0.02

    out = denoising_self_attention(x, w_qkv, b_qkv, w_proj, b_proj, n_head=n_head)
    out = jax.block_until_ready(out)

    ref = reference_attention(x, w_qkv, b_qkv, w_proj, b_proj, n_head=n_head)
    assert out.shape == (B, T, n_embed)
    # Tolerance covers bf16 MXU operands (f32 accumulation) and the EUP
    # approximate reciprocal in the softmax denominator.
    assert jnp.allclose(out, ref, atol=3e-3, rtol=2e-2), "mismatch vs reference"

    print("KERNEL_OK")
</pallas_src>

<mosaic_0001>
module attributes {stable_mosaic.version = 11 : i64} {
  func.func @_attention_kernel(%arg0: i32, %arg1: i32, %arg2: memref<8x32xbf16, #tpu.memory_space<vmem>>, %arg3: memref<1x32x8xbf16, #tpu.memory_space<vmem>>, %arg4: memref<1x1x8xf32, #tpu.memory_space<vmem>>, %arg5: memref<1x32x8xbf16, #tpu.memory_space<vmem>>, %arg6: memref<1x1x8xf32, #tpu.memory_space<vmem>>, %arg7: memref<1x32x8xbf16, #tpu.memory_space<vmem>>, %arg8: memref<1x1x8xf32, #tpu.memory_space<vmem>>, %arg9: memref<1x8x32xbf16, #tpu.memory_space<vmem>>, %arg10: memref<1x32xf32, #tpu.memory_space<vmem>>, %arg11: memref<8x32xf32, #tpu.memory_space<vmem>>, %arg12: memref<8x32xf32, #tpu.memory_space<vmem>>) attributes {dimension_semantics = [#tpu.dimension_semantics<parallel>, #tpu.dimension_semantics<arbitrary>], iteration_bounds = array<i64: 2, 4>, scalar_prefetch = 0 : i64, scratch_operands = 1 : i64, tpu.core_type = #tpu.core_type<tc>, window_params = [{transform_indices = @transform_0, window_bounds = array<i64: 8, 32>}, {transform_indices = @transform_1, window_bounds = array<i64: 1, 32, 8>}, {transform_indices = @transform_2, window_bounds = array<i64: 1, 1, 8>}, {transform_indices = @transform_3, window_bounds = array<i64: 1, 32, 8>}, {transform_indices = @transform_4, window_bounds = array<i64: 1, 1, 8>}, {transform_indices = @transform_5, window_bounds = array<i64: 1, 32, 8>}, {transform_indices = @transform_6, window_bounds = array<i64: 1, 1, 8>}, {transform_indices = @transform_7, window_bounds = array<i64: 1, 8, 32>}, {pipeline_mode = #tpu.pipeline_mode<synchronous>, transform_indices = @transform_8, window_bounds = array<i64: 1, 32>}, {transform_indices = @transform_9, window_bounds = array<i64: 8, 32>}]} {
    %c0_i32 = arith.constant 0 : i32
    %0 = arith.cmpi eq, %arg1, %c0_i32 : i32
    %1 = arith.extui %0 : i1 to i32
    %c0_i32_0 = arith.constant 0 : i32
    %2 = arith.cmpi ne, %1, %c0_i32_0 : i32
    scf.if %2 {
      %cst_36 = arith.constant 0.000000e+00 : f32
      %57 = vector.broadcast %cst_36 : f32 to vector<8x32xf32>
      %c0_37 = arith.constant 0 : index
      %c0_38 = arith.constant 0 : index
      %58 = vector.load %arg12[%c0_37, %c0_38] : memref<8x32xf32, #tpu.memory_space<vmem>>, vector<8x32xf32>
      tpu.vector_store %arg12[%c0_37, %c0_38], %57 {strides = array<i32>} : memref<8x32xf32, #tpu.memory_space<vmem>>, vector<8x32xf32>,
    } else {
    }
    %c0 = arith.constant 0 : index
    %c0_1 = arith.constant 0 : index
    %3 = vector.load %arg2[%c0, %c0_1] : memref<8x32xbf16, #tpu.memory_space<vmem>>, vector<8x32xbf16>
    %c0_2 = arith.constant 0 : index
    %c0_3 = arith.constant 0 : index
    %c0_4 = arith.constant 0 : index
    %4 = vector.load %arg3[%c0_2, %c0_3, %c0_4] : memref<1x32x8xbf16, #tpu.memory_space<vmem>>, vector<1x32x8xbf16>
    %5 = vector.shape_cast %4 : vector<1x32x8xbf16> to vector<32x8xbf16>
    %cst = arith.constant dense<0.000000e+00> : vector<8x8xf32>
    %6 = tpu.matmul %3, %5, %cst {dimension_numbers = #tpu.dot_dimension_numbers<[1], [0], [0], [1], [0, 0, 1, 1], [], []>} : vector<8x32xbf16>, vector<32x8xbf16>, vector<8x8xf32> -> vector<8x8xf32>
    %c0_5 = arith.constant 0 : index
    %c0_6 = arith.constant 0 : index
    %c0_7 = arith.constant 0 : index
    %7 = vector.load %arg4[%c0_5, %c0_6, %c0_7] : memref<1x1x8xf32, #tpu.memory_space<vmem>>, vector<1x1x8xf32>
    %8 = vector.shape_cast %7 : vector<1x1x8xf32> to vector<1x8xf32>
    %9 = vector.broadcast %8 : vector<1x8xf32> to vector<8x8xf32>
    %10 = arith.addf %6, %9 : vector<8x8xf32>
    %c0_8 = arith.constant 0 : index
    %c0_9 = arith.constant 0 : index
    %c0_10 = arith.constant 0 : index
    %11 = vector.load %arg5[%c0_8, %c0_9, %c0_10] : memref<1x32x8xbf16, #tpu.memory_space<vmem>>, vector<1x32x8xbf16>
    %12 = vector.shape_cast %11 : vector<1x32x8xbf16> to vector<32x8xbf16>
    %cst_11 = arith.constant dense<0.000000e+00> : vector<8x8xf32>
    %13 = tpu.matmul %3, %12, %cst_11 {dimension_numbers = #tpu.dot_dimension_numbers<[1], [0], [0], [1], [0, 0, 1, 1], [], []>} : vector<8x32xbf16>, vector<32x8xbf16>, vector<8x8xf32> -> vector<8x8xf32>
    %c0_12 = arith.constant 0 : index
    %c0_13 = arith.constant 0 : index
    %c0_14 = arith.constant 0 : index
    %14 = vector.load %arg6[%c0_12, %c0_13, %c0_14] : memref<1x1x8xf32, #tpu.memory_space<vmem>>, vector<1x1x8xf32>
    %15 = vector.shape_cast %14 : vector<1x1x8xf32> to vector<1x8xf32>
    %16 = vector.broadcast %15 : vector<1x8xf32> to vector<8x8xf32>
    %17 = arith.addf %13, %16 : vector<8x8xf32>
    %c0_15 = arith.constant 0 : index
    %c0_16 = arith.constant 0 : index
    %c0_17 = arith.constant 0 : index
    %18 = vector.load %arg7[%c0_15, %c0_16, %c0_17] : memref<1x32x8xbf16, #tpu.memory_space<vmem>>, vector<1x32x8xbf16>
    %19 = vector.shape_cast %18 : vector<1x32x8xbf16> to vector<32x8xbf16>
    %cst_18 = arith.constant dense<0.000000e+00> : vector<8x8xf32>
    %20 = tpu.matmul %3, %19, %cst_18 {dimension_numbers = #tpu.dot_dimension_numbers<[1], [0], [0], [1], [0, 0, 1, 1], [], []>} : vector<8x32xbf16>, vector<32x8xbf16>, vector<8x8xf32> -> vector<8x8xf32>
    %c0_19 = arith.constant 0 : index
    %c0_20 = arith.constant 0 : index
    %c0_21 = arith.constant 0 : index
    %21 = vector.load %arg8[%c0_19, %c0_20, %c0_21] : memref<1x1x8xf32, #tpu.memory_space<vmem>>, vector<1x1x8xf32>
    %22 = vector.shape_cast %21 : vector<1x1x8xf32> to vector<1x8xf32>
    %23 = vector.broadcast %22 : vector<1x8xf32> to vector<8x8xf32>
    %24 = arith.addf %20, %23 : vector<8x8xf32>
    %cst_22 = arith.constant 0.353553385 : f32
    %25 = vector.broadcast %cst_22 : f32 to vector<8x8xf32>
    %26 = arith.mulf %10, %25 : vector<8x8xf32>
    %27 = vector.shape_cast %26 : vector<8x8xf32> to vector<1x8x8xf32>
    %28 = arith.truncf %27 : vector<1x8x8xf32> to vector<1x8x8xbf16>
    %29 = vector.shape_cast %17 : vector<8x8xf32> to vector<1x8x8xf32>
    %30 = arith.truncf %29 : vector<1x8x8xf32> to vector<1x8x8xbf16>
    %31 = vector.shape_cast %24 : vector<8x8xf32> to vector<1x8x8xf32>
    %32 = arith.truncf %31 : vector<1x8x8xf32> to vector<1x8x8xbf16>
    "tpu.trace_start"() <{level = 10 : i32, message = "bqd,bkd->bqk"}> : () -> ()
    %cst_23 = arith.constant dense<0.000000e+00> : vector<1x8x8xf32>
    %33 = tpu.matmul %28, %30, %cst_23 {dimension_numbers = #tpu.dot_dimension_numbers<[2], [2], [1], [1], [0, 0, 0, 1, 1, 1], [0], [0]>} : vector<1x8x8xbf16>, vector<1x8x8xbf16>, vector<1x8x8xf32> -> vector<1x8x8xf32>
    "tpu.trace_stop"() : () -> ()
    %cst_24 = arith.constant dense<0xFF800000> : vector<1x8xf32>
    %34 = vector.multi_reduction <maximumf>, %33, %cst_24 [2] : vector<1x8x8xf32> to vector<1x8xf32>
    %35 = vector.shape_cast %34 : vector<1x8xf32> to vector<1x8x1xf32>
    %36 = vector.broadcast %35 : vector<1x8x1xf32> to vector<1x8x8xf32>
    %37 = arith.subf %33, %36 : vector<1x8x8xf32>
    %38 = math.exp %37 : vector<1x8x8xf32>
    %cst_25 = arith.constant dense<0.000000e+00> : vector<1x8xf32>
    %39 = vector.multi_reduction <add>, %38, %cst_25 [2] : vector<1x8x8xf32> to vector<1x8xf32>
    %40 = vector.shape_cast %39 : vector<1x8xf32> to vector<1x8x1xf32>
    %41 = tpu.reciprocal %40 {approx = true} : vector<1x8x1xf32> -> vector<1x8x1xf32>
    %42 = vector.broadcast %41 : vector<1x8x1xf32> to vector<1x8x8xf32>
    %43 = arith.mulf %38, %42 : vector<1x8x8xf32>
    %44 = arith.truncf %43 : vector<1x8x8xf32> to vector<1x8x8xbf16>
    "tpu.trace_start"() <{level = 10 : i32, message = "bqk,bkd->bqd"}> : () -> ()
    %cst_26 = arith.constant dense<0.000000e+00> : vector<1x8x8xf32>
    %45 = tpu.matmul %44, %32, %cst_26 {dimension_numbers = #tpu.dot_dimension_numbers<[2], [1], [1], [2], [0, 0, 0, 1, 1, 2], [0], [0]>} : vector<1x8x8xbf16>, vector<1x8x8xbf16>, vector<1x8x8xf32> -> vector<1x8x8xf32>
    "tpu.trace_stop"() : () -> ()
    %46 = vector.shape_cast %45 : vector<1x8x8xf32> to vector<8x8xf32>
    %47 = arith.truncf %46 : vector<8x8xf32> to vector<8x8xbf16>
    %c0_27 = arith.constant 0 : index
    %c0_28 = arith.constant 0 : index
    %48 = vector.load %arg12[%c0_27, %c0_28] : memref<8x32xf32, #tpu.memory_space<vmem>>, vector<8x32xf32>
    %c0_29 = arith.constant 0 : index
    %c0_30 = arith.constant 0 : index
    %c0_31 = arith.constant 0 : index
    %49 = vector.load %arg9[%c0_29, %c0_30, %c0_31] : memref<1x8x32xbf16, #tpu.memory_space<vmem>>, vector<1x8x32xbf16>
    %50 = vector.shape_cast %49 : vector<1x8x32xbf16> to vector<8x32xbf16>
    %cst_32 = arith.constant dense<0.000000e+00> : vector<8x32xf32>
    %51 = tpu.matmul %47, %50, %cst_32 {dimension_numbers = #tpu.dot_dimension_numbers<[1], [0], [0], [1], [0, 0, 1, 1], [], []>} : vector<8x8xbf16>, vector<8x32xbf16>, vector<8x32xf32> -> vector<8x32xf32>
    %52 = arith.addf %48, %51 : vector<8x32xf32>
    %c0_33 = arith.constant 0 : index
    %c0_34 = arith.constant 0 : index
    %53 = vector.load %arg12[%c0_33, %c0_34] : memref<8x32xf32, #tpu.memory_space<vmem>>, vector<8x32xf32>
    tpu.vector_store %arg12[%c0_33, %c0_34], %52 {strides = array<i32>} : memref<8x32xf32, #tpu.memory_space<vmem>>, vector<8x32xf32>,
    %c3_i32 = arith.constant 3 : i32
    %54 = arith.cmpi eq, %arg1, %c3_i32 : i32
    %55 = arith.extui %54 : i1 to i32
    %c0_i32_35 = arith.constant 0 : i32
    %56 = arith.cmpi ne, %55, %c0_i32_35 : i32
    scf.if %56 {
      %c0_36 = arith.constant 0 : index
      %c0_37 = arith.constant 0 : index
      %57 = vector.load %arg12[%c0_36, %c0_37] : memref<8x32xf32, #tpu.memory_space<vmem>>, vector<8x32xf32>
      %c0_38 = arith.constant 0 : index
      %c0_39 = arith.constant 0 : index
      %58 = vector.load %arg10[%c0_38, %c0_39] : memref<1x32xf32, #tpu.memory_space<vmem>>, vector<1x32xf32>
      %59 = vector.broadcast %58 : vector<1x32xf32> to vector<8x32xf32>
      %60 = arith.addf %57, %59 : vector<8x32xf32>
      %c0_40 = arith.constant 0 : index
      %c0_41 = arith.constant 0 : index
      %61 = vector.load %arg11[%c0_40, %c0_41] : memref<8x32xf32, #tpu.memory_space<vmem>>, vector<8x32xf32>
      tpu.vector_store %arg11[%c0_40, %c0_41], %60 {strides = array<i32>} : memref<8x32xf32, #tpu.memory_space<vmem>>, vector<8x32xf32>,
    } else {
    }
    return
  }
  func.func @transform_0(%arg0: i32, %arg1: i32) -> (i32, i32) {
    %c0_i32 = arith.constant 0 : i32
    %c0_i32_0 = arith.constant 0 : i32
    return %arg0, %c0_i32 : i32, i32
  }
  func.func @transform_1(%arg0: i32, %arg1: i32) -> (i32, i32, i32) {
    %c0_i32 = arith.constant 0 : i32
    %c0_i32_0 = arith.constant 0 : i32
    %c0_i32_1 = arith.constant 0 : i32
    return %arg1, %c0_i32, %c0_i32_0 : i32, i32, i32
  }
  func.func @transform_2(%arg0: i32, %arg1: i32) -> (i32, i32, i32) {
    %c0_i32 = arith.constant 0 : i32
    %c0_i32_0 = arith.constant 0 : i32
    %c0_i32_1 = arith.constant 0 : i32
    return %arg1, %c0_i32, %c0_i32_0 : i32, i32, i32
  }
  func.func @transform_3(%arg0: i32, %arg1: i32) -> (i32, i32, i32) {
    %c0_i32 = arith.constant 0 : i32
    %c0_i32_0 = arith.constant 0 : i32
    %c0_i32_1 = arith.constant 0 : i32
    return %arg1, %c0_i32, %c0_i32_0 : i32, i32, i32
  }
  func.func @transform_4(%arg0: i32, %arg1: i32) -> (i32, i32, i32) {
    %c0_i32 = arith.constant 0 : i32
    %c0_i32_0 = arith.constant 0 : i32
    %c0_i32_1 = arith.constant 0 : i32
    return %arg1, %c0_i32, %c0_i32_0 : i32, i32, i32
  }
  func.func @transform_5(%arg0: i32, %arg1: i32) -> (i32, i32, i32) {
    %c0_i32 = arith.constant 0 : i32
    %c0_i32_0 = arith.constant 0 : i32
    %c0_i32_1 = arith.constant 0 : i32
    return %arg1, %c0_i32, %c0_i32_0 : i32, i32, i32
  }
  func.func @transform_6(%arg0: i32, %arg1: i32) -> (i32, i32, i32) {
    %c0_i32 = arith.constant 0 : i32
    %c0_i32_0 = arith.constant 0 : i32
    %c0_i32_1 = arith.constant 0 : i32
    return %arg1, %c0_i32, %c0_i32_0 : i32, i32, i32
  }
  func.func @transform_7(%arg0: i32, %arg1: i32) -> (i32, i32, i32) {
    %c0_i32 = arith.constant 0 : i32
    %c0_i32_0 = arith.constant 0 : i32
    %c0_i32_1 = arith.constant 0 : i32
    return %arg1, %c0_i32, %c0_i32_0 : i32, i32, i32
  }
  func.func @transform_8(%arg0: i32, %arg1: i32) -> (i32, i32) {
    %c0_i32 = arith.constant 0 : i32
    %c0_i32_0 = arith.constant 0 : i32
    %c0_i32_1 = arith.constant 0 : i32
    return %c0_i32, %c0_i32_0 : i32, i32
  }
  func.func @transform_9(%arg0: i32, %arg1: i32) -> (i32, i32) {
    %c0_i32 = arith.constant 0 : i32
    %c0_i32_0 = arith.constant 0 : i32
    return %arg0, %c0_i32 : i32, i32
  }
}

</mosaic_0001>

<llo_original>
// kernel: tpu_custom_call.1
$region0: #{tpu_custom_call.1}
  #allocation0 [shape = 'u32[]', space=smem, size = 0x4, offset = 0x4, fixed_abs, tag = 'smem constant byte address 0x4 - core index']
  #allocation1 [shape = 'u32[144,128]{1,0:T(1,128)}', space=vmem, size = 0x12000, scoped, tag = 'internal scratch']
  #allocation2 [shape = 'f32[8,32]{1,0:T(8,128)}', space=vmem, size = 0x1000, scoped, tag = 'scratch operand']
  %s0 = inlined_call_operand.vmem [shape: bf16[16,32], index: 0, kind: input, shape index: {}]
  %s1 = inlined_call_operand.vmem [shape: bf16[4,32,8], index: 1, kind: input, shape index: {}]
  %s2 = inlined_call_operand.vmem [shape: f32[4,1,8], index: 2, kind: input, shape index: {}]
  %s3 = inlined_call_operand.vmem [shape: bf16[4,32,8], index: 3, kind: input, shape index: {}]
  %s4 = inlined_call_operand.vmem [shape: f32[4,1,8], index: 4, kind: input, shape index: {}]
  %s5 = inlined_call_operand.vmem [shape: bf16[4,32,8], index: 5, kind: input, shape index: {}]
  %s6 = inlined_call_operand.vmem [shape: f32[4,1,8], index: 6, kind: input, shape index: {}]
  %s7 = inlined_call_operand.vmem [shape: bf16[4,8,32], index: 7, kind: input, shape index: {}]
  %s8 = inlined_call_operand.vmem [shape: f32[1,32], index: 8, kind: input, shape index: {}]
  %s9 = inlined_call_operand.hbm [shape: f32[16,32], index: 9, kind: output, shape index: {}]
  %s10 = sld [smem:[#allocation0]]
  $region77: #{tpu_custom_call.1} parent=0
    _
  %s12 = ssub.s32 1, %s10
  %s13 = scalar_select 0, %s12, %s10
  $region1: #{tpu_custom_call.1} parent=0
    #allocation3 [shape = 'u8[8192]{0}', space=vmem, size = 0x2000, scoped, tag = 'output window, operand 0']
    #allocation4 [shape = 's32[2]{0}', space=sflag, size = 0x8, scoped, tag = 'scoped memory for tpu_custom_call.1']
    %14 = vsyncpa [#allocation4], 0
    %s15 = scalar_lea.sflag [#allocation4], 1
    %16 = vsyncpa %s15, 0
    loop: start=0, step=1, limit=10
    $region2: #{tpu_custom_call.1} parent=1 // loop_pre_header
      _
    $region3: #{tpu_custom_call.1} parent=1 // loop_header
      %s18 = sphi 0, %s22
      %p19 = scmp.ge.s32.totalorder %s18, 10
      %s25 = sphi 0, %s37
      %s26 = sphi 0, %s33
      %s27 = sphi 0, %s25
      %s28 = sphi 0, %s26
      %s29 = sphi 0, %s27
      %s30 = sphi 0, %s28
      %s40 = sphi 0, %s42
      %s43 = sphi 0, %s40
      %s44 = sphi 0, %s43
      %s60 = sphi 0, %s44
      %s66 = sphi 0, %s68
      %s69 = sphi 0, %s66
      %s70 = sphi 0, %s69
      %s86 = sphi 0, %s70
      %s92 = sphi 0, %s94
      %s95 = sphi 0, %s92
      %s96 = sphi 0, %s95
      %s112 = sphi 0, %s96
      %s118 = sphi 0, %s120
      %s121 = sphi 0, %s118
      %s122 = sphi 0, %s121
      %s138 = sphi 0, %s122
      %s144 = sphi 0, %s146
      %s147 = sphi 0, %s144
      %s148 = sphi 0, %s147
      %s164 = sphi 0, %s148
      %s170 = sphi 0, %s172
      %s173 = sphi 0, %s170
      %s174 = sphi 0, %s173
      %s190 = sphi 0, %s174
      %s196 = sphi 0, %s198
      %s199 = sphi 0, %s196
      %s200 = sphi 0, %s199
      %s216 = sphi 0, %s200
      %s222 = sphi 0, %s224
      %s225 = sphi 0, %s222
      %s226 = sphi 0, %s225
      %s242 = sphi 0, %s226
      %s246 = sphi 0, %s246
      %s248 = sphi 0, %s246
      %s249 = sphi 0, %s248
      %s263 = sphi 0, %s249
      %s269 = sphi 0, %s271
      %s272 = sphi 0, %s269
      %s273 = sphi 0, %s272
      %s289 = sphi 0, %s273
    $region4: #{tpu_custom_call.1} parent=1 // loop_header_branch
      %21 = sbr.rel (%p19) target = $region8
    $region5: #{tpu_custom_call.1} parent=1 // loop_body
      %s23 = ssub.s32 %s18, 1
      %s24 = ssub.s32 %s18, 2
      %s31 = sadd.s32 1, %s26
      %p32 = scmp.ge.s32.totalorder %s31, 4
      %s33 = scalar_select %p32, 0, %s31
      %s34 = sadd.s32 1, %s25
      %s35 = scalar_select %p32, %s34, %s25
      %p36 = scmp.ge.s32.totalorder %s35, 2
      %s37 = scalar_select %p36, 0, %s35
      %s38 = ssub.s32 %s25, %s37
      %p39 = scmp.eq.s32.totalorder %s38, 0
      %s41 = sadd.s32 %s40, 1
      %s42 = scalar_select %p39, %s40, %s41
      %p45 = pneg %p39
      %p46 = scmp.eq.s32.totalorder %s18, 7
      %p47 = por %p45, %p46
      %p48 = scmp.ne.s32.totalorder %s40, %s43
      %p49 = scmp.eq.s32.totalorder %s18, 0
      %p50 = por %p48, %p49
      %p51 = scmp.ne.s32.totalorder %s40, %s43
      %p52 = scmp.eq.s32.totalorder %s23, 7
      %p53 = por %p51, %p52
      %p54 = scmp.ne.s32.totalorder %s43, %s44
      %p55 = scmp.eq.s32.totalorder %s23, 0
      %p56 = por %p54, %p55
      %p57 = scmp.ne.s32.totalorder %s43, %s44
      %p58 = scmp.eq.s32.totalorder %s24, 7
      %p59 = por %p57, %p58
      %p61 = scmp.ne.s32.totalorder %s44, %s60
      %p62 = scmp.eq.s32.totalorder %s24, 0
      %p63 = por %p61, %p62
      %s64 = ssub.s32 %s26, %s33
      %p65 = scmp.eq.s32.totalorder %s64, 0
      %s67 = sadd.s32 %s66, 1
      %s68 = scalar_select %p65, %s66, %s67
      %p71 = pneg %p65
      %p72 = scmp.eq.s32.totalorder %s18, 7
      %p73 = por %p71, %p72
      %p74 = scmp.ne.s32.totalorder %s66, %s69
      %p75 = scmp.eq.s32.totalorder %s18, 0
      %p76 = por %p74, %p75
      %p77 = scmp.ne.s32.totalorder %s66, %s69
      %p78 = scmp.eq.s32.totalorder %s23, 7
      %p79 = por %p77, %p78
      %p80 = scmp.ne.s32.totalorder %s69, %s70
      %p81 = scmp.eq.s32.totalorder %s23, 0
      %p82 = por %p80, %p81
      %p83 = scmp.ne.s32.totalorder %s69, %s70
      %p84 = scmp.eq.s32.totalorder %s24, 7
      %p85 = por %p83, %p84
      %p87 = scmp.ne.s32.totalorder %s70, %s86
      %p88 = scmp.eq.s32.totalorder %s24, 0
      %p89 = por %p87, %p88
      %s90 = ssub.s32 %s26, %s33
      %p91 = scmp.eq.s32.totalorder %s90, 0
      %s93 = sadd.s32 %s92, 1
      %s94 = scalar_select %p91, %s92, %s93
      %p97 = pneg %p91
      %p98 = scmp.eq.s32.totalorder %s18, 7
      %p99 = por %p97, %p98
      %p100 = scmp.ne.s32.totalorder %s92, %s95
      %p101 = scmp.eq.s32.totalorder %s18, 0
      %p102 = por %p100, %p101
      %p103 = scmp.ne.s32.totalorder %s92, %s95
      %p104 = scmp.eq.s32.totalorder %s23, 7
      %p105 = por %p103, %p104
      %p106 = scmp.ne.s32.totalorder %s95, %s96
      %p107 = scmp.eq.s32.totalorder %s23, 0
      %p108 = por %p106, %p107
      %p109 = scmp.ne.s32.totalorder %s95, %s96
      %p110 = scmp.eq.s32.totalorder %s24, 7
      %p111 = por %p109, %p110
      %p113 = scmp.ne.s32.totalorder %s96, %s112
      %p114 = scmp.eq.s32.totalorder %s24, 0
      %p115 = por %p113, %p114
      %s116 = ssub.s32 %s26, %s33
      %p117 = scmp.eq.s32.totalorder %s116, 0
      %s119 = sadd.s32 %s118, 1
      %s120 = scalar_select %p117, %s118, %s119
      %p123 = pneg %p117
      %p124 = scmp.eq.s32.totalorder %s18, 7
      %p125 = por %p123, %p124
      %p126 = scmp.ne.s32.totalorder %s118, %s121
      %p127 = scmp.eq.s32.totalorder %s18, 0
      %p128 = por %p126, %p127
      %p129 = scmp.ne.s32.totalorder %s118, %s121
      %p130 = scmp.eq.s32.totalorder %s23, 7
      %p131 = por %p129, %p130
      %p132 = scmp.ne.s32.totalorder %s121, %s122
      %p133 = scmp.eq.s32.totalorder %s23, 0
      %p134 = por %p132, %p133
      %p135 = scmp.ne.s32.totalorder %s121, %s122
      %p136 = scmp.eq.s32.totalorder %s24, 7
      %p137 = por %p135, %p136
      %p139 = scmp.ne.s32.totalorder %s122, %s138
      %p140 = scmp.eq.s32.totalorder %s24, 0
      %p141 = por %p139, %p140
      %s142 = ssub.s32 %s26, %s33
      %p143 = scmp.eq.s32.totalorder %s142, 0
      %s145 = sadd.s32 %s144, 1
      %s146 = scalar_select %p143, %s144, %s145
      %p149 = pneg %p143
      %p150 = scmp.eq.s32.totalorder %s18, 7
      %p151 = por %p149, %p150
      %p152 = scmp.ne.s32.totalorder %s144, %s147
      %p153 = scmp.eq.s32.totalorder %s18, 0
      %p154 = por %p152, %p153
      %p155 = scmp.ne.s32.totalorder %s144, %s147
      %p156 = scmp.eq.s32.totalorder %s23, 7
      %p157 = por %p155, %p156
      %p158 = scmp.ne.s32.totalorder %s147, %s148
      %p159 = scmp.eq.s32.totalorder %s23, 0
      %p160 = por %p158, %p159
      %p161 = scmp.ne.s32.totalorder %s147, %s148
      %p162 = scmp.eq.s32.totalorder %s24, 7
      %p163 = por %p161, %p162
      %p165 = scmp.ne.s32.totalorder %s148, %s164
      %p166 = scmp.eq.s32.totalorder %s24, 0
      %p167 = por %p165, %p166
      %s168 = ssub.s32 %s26, %s33
      %p169 = scmp.eq.s32.totalorder %s168, 0
      %s171 = sadd.s32 %s170, 1
      %s172 = scalar_select %p169, %s170, %s171
      %p175 = pneg %p169
      %p176 = scmp.eq.s32.totalorder %s18, 7
      %p177 = por %p175, %p176
      %p178 = scmp.ne.s32.totalorder %s170, %s173
      %p179 = scmp.eq.s32.totalorder %s18, 0
      %p180 = por %p178, %p179
      %p181 = scmp.ne.s32.totalorder %s170, %s173
      %p182 = scmp.eq.s32.totalorder %s23, 7
      %p183 = por %p181, %p182
      %p184 = scmp.ne.s32.totalorder %s173, %s174
      %p185 = scmp.eq.s32.totalorder %s23, 0
      %p186 = por %p184, %p185
      %p187 = scmp.ne.s32.totalorder %s173, %s174
      %p188 = scmp.eq.s32.totalorder %s24, 7
      %p189 = por %p187, %p188
      %p191 = scmp.ne.s32.totalorder %s174, %s190
      %p192 = scmp.eq.s32.totalorder %s24, 0
      %p193 = por %p191, %p192
      %s194 = ssub.s32 %s26, %s33
      %p195 = scmp.eq.s32.totalorder %s194, 0
      %s197 = sadd.s32 %s196, 1
      %s198 = scalar_select %p195, %s196, %s197
      %p201 = pneg %p195
      %p202 = scmp.eq.s32.totalorder %s18, 7
      %p203 = por %p201, %p202
      %p204 = scmp.ne.s32.totalorder %s196, %s199
      %p205 = scmp.eq.s32.totalorder %s18, 0
      %p206 = por %p204, %p205
      %p207 = scmp.ne.s32.totalorder %s196, %s199
      %p208 = scmp.eq.s32.totalorder %s23, 7
      %p209 = por %p207, %p208
      %p210 = scmp.ne.s32.totalorder %s199, %s200
      %p211 = scmp.eq.s32.totalorder %s23, 0
      %p212 = por %p210, %p211
      %p213 = scmp.ne.s32.totalorder %s199, %s200
      %p214 = scmp.eq.s32.totalorder %s24, 7
      %p215 = por %p213, %p214
      %p217 = scmp.ne.s32.totalorder %s200, %s216
      %p218 = scmp.eq.s32.totalorder %s24, 0
      %p219 = por %p217, %p218
      %s220 = ssub.s32 %s26, %s33
      %p221 = scmp.eq.s32.totalorder %s220, 0
      %s223 = sadd.s32 %s222, 1
      %s224 = scalar_select %p221, %s222, %s223
      %p227 = pneg %p221
      %p228 = scmp.eq.s32.totalorder %s18, 7
      %p229 = por %p227, %p228
      %p230 = scmp.ne.s32.totalorder %s222, %s225
      %p231 = scmp.eq.s32.totalorder %s18, 0
      %p232 = por %p230, %p231
      %p233 = scmp.ne.s32.totalorder %s222, %s225
      %p234 = scmp.eq.s32.totalorder %s23, 7
      %p235 = por %p233, %p234
      %p236 = scmp.ne.s32.totalorder %s225, %s226
      %p237 = scmp.eq.s32.totalorder %s23, 0
      %p238 = por %p236, %p237
      %p239 = scmp.ne.s32.totalorder %s225, %s226
      %p240 = scmp.eq.s32.totalorder %s24, 7
      %p241 = por %p239, %p240
      %p243 = scmp.ne.s32.totalorder %s226, %s242
      %p244 = scmp.eq.s32.totalorder %s24, 0
      %p245 = por %p243, %p244
      %s247 = sadd.s32 %s246, 1
      %p250 = scmp.eq.s32.totalorder %s18, 7
      %p251 = scmp.ne.s32.totalorder %s246, %s248
      %p252 = scmp.eq.s32.totalorder %s18, 0
      %p253 = por %p251, %p252
      %p254 = scmp.ne.s32.totalorder %s246, %s248
      %p255 = scmp.eq.s32.totalorder %s23, 7
      %p256 = por %p254, %p255
      %p257 = scmp.ne.s32.totalorder %s248, %s249
      %p258 = scmp.eq.s32.totalorder %s23, 0
      %p259 = por %p257, %p258
      %p260 = scmp.ne.s32.totalorder %s248, %s249
      %p261 = scmp.eq.s32.totalorder %s24, 7
      %p262 = por %p260, %p261
      %p264 = scmp.ne.s32.totalorder %s249, %s263
      %p265 = scmp.eq.s32.totalorder %s24, 0
      %p266 = por %p264, %p265
      %s267 = ssub.s32 %s25, %s37
      %p268 = scmp.eq.s32.totalorder %s267, 0
      %s270 = sadd.s32 %s269, 1
      %s271 = scalar_select %p268, %s269, %s270
      %p274 = pneg %p268
      %p275 = scmp.eq.s32.totalorder %s18, 7
      %p276 = por %p274, %p275
      %p277 = scmp.ne.s32.totalorder %s269, %s272
      %p278 = scmp.eq.s32.totalorder %s18, 0
      %p279 = por %p277, %p278
      %p280 = scmp.ne.s32.totalorder %s269, %s272
      %p281 = scmp.eq.s32.totalorder %s23, 7
      %p282 = por %p280, %p281
      %p283 = scmp.ne.s32.totalorder %s272, %s273
      %p284 = scmp.eq.s32.totalorder %s23, 0
      %p285 = por %p283, %p284
      %p286 = scmp.ne.s32.totalorder %s272, %s273
      %p287 = scmp.eq.s32.totalorder %s24, 7
      %p288 = por %p286, %p287
      %p290 = scmp.ne.s32.totalorder %s273, %s289
      %p291 = scmp.eq.s32.totalorder %s24, 0
      %p292 = por %p290, %p291
      %p293 = scmp.le.s32.totalorder 1, %s18
      %p294 = scmp.lt.s32.totalorder %s18, 9
      %p295 = pnand %p293, %p294
      %p296 = pneg %p295
      // Predicated region
      $region9: #{tpu_custom_call.1} parent=5 // pred_check
        _
      $region10: #{tpu_custom_call.1} parent=5 // pred_check_branch
        %298 = sbr.rel (%p295) target = $region12
      $region11: #{tpu_custom_call.1} parent=5 // pred_region
        %s299 = ssub.s32 %s18, 1
        // Predicated region
        $region13: #{tpu_custom_call.1} parent=11 // pred_check
          %p300 = pneg %p259
        $region14: #{tpu_custom_call.1} parent=11 // pred_check_branch
          %302 = sbr.rel (%p300) target = $region16
        $region15: #{tpu_custom_call.1} parent=11 // pred_region
          _
        $region16: #{tpu_custom_call.1} parent=11 // pred_fallthru
          _
      $region12: #{tpu_custom_call.1} parent=5 // pred_fallthru
        _
      %p303 = scmp.lt.s32.totalorder %s18, 8
      // Predicated region
      $region17: #{tpu_custom_call.1} parent=5 // pred_check
        %p304 = pneg %p303
      $region18: #{tpu_custom_call.1} parent=5 // pred_check_branch
        %306 = sbr.rel (%p304) target = $region20
      $region19: #{tpu_custom_call.1} parent=5 // pred_region
        // Predicated region
        $region21: #{tpu_custom_call.1} parent=19 // pred_check
          %p307 = pneg %p50
        $region22: #{tpu_custom_call.1} parent=19 // pred_check_branch
          %309 = sbr.rel (%p307) target = $region24
        $region23: #{tpu_custom_call.1} parent=19 // pred_region
          %p310 = scmp.lt.s32.totalorder %s25, 1
          %s311 = scalar_select %p310, %s25, 1
          %s312 = smul.addr %s311, 4
          %s313 = scalar_lea.vmem %s0, %s312
        $region24: #{tpu_custom_call.1} parent=19 // pred_fallthru
          _
        // Predicated region
        $region25: #{tpu_custom_call.1} parent=19 // pred_check
          %p314 = pneg %p76
        $region26: #{tpu_custom_call.1} parent=19 // pred_check_branch
          %316 = sbr.rel (%p314) target = $region28
        $region27: #{tpu_custom_call.1} parent=19 // pred_region
          %p317 = scmp.lt.s32.totalorder %s26, 3
          %s318 = scalar_select %p317, %s26, 3
          %s319 = smul.addr %s318, 4
          %s320 = smul.addr %s319, 4
          %s321 = scalar_lea.vmem %s1, %s320
        $region28: #{tpu_custom_call.1} parent=19 // pred_fallthru
          _
        // Predicated region
        $region29: #{tpu_custom_call.1} parent=19 // pred_check
          %p322 = pneg %p102
        $region30: #{tpu_custom_call.1} parent=19 // pred_check_branch
          %324 = sbr.rel (%p322) target = $region32
        $region31: #{tpu_custom_call.1} parent=19 // pred_region
          %p325 = scmp.lt.s32.totalorder %s26, 3
          %s326 = scalar_select %p325, %s26, 3
          %s327 = scalar_lea.vmem %s2, %s326
        $region32: #{tpu_custom_call.1} parent=19 // pred_fallthru
          _
        // Predicated region
        $region33: #{tpu_custom_call.1} parent=19 // pred_check
          %p328 = pneg %p128
        $region34: #{tpu_custom_call.1} parent=19 // pred_check_branch
          %330 = sbr.rel (%p328) target = $region36
        $region35: #{tpu_custom_call.1} parent=19 // pred_region
          %p331 = scmp.lt.s32.totalorder %s26, 3
          %s332 = scalar_select %p331, %s26, 3
          %s333 = smul.addr %s332, 4
          %s334 = smul.addr %s333, 4
          %s335 = scalar_lea.vmem %s3, %s334
        $region36: #{tpu_custom_call.1} parent=19 // pred_fallthru
          _
        // Predicated region
        $region37: #{tpu_custom_call.1} parent=19 // pred_check
          %p336 = pneg %p154
        $region38: #{tpu_custom_call.1} parent=19 // pred_check_branch
          %338 = sbr.rel (%p336) target = $region40
        $region39: #{tpu_custom_call.1} parent=19 // pred_region
          %p339 = scmp.lt.s32.totalorder %s26, 3
          %s340 = scalar_select %p339, %s26, 3
          %s341 = scalar_lea.vmem %s4, %s340
        $region40: #{tpu_custom_call.1} parent=19 // pred_fallthru
          _
        // Predicated region
        $region41: #{tpu_custom_call.1} parent=19 // pred_check
          %p342 = pneg %p180
        $region42: #{tpu_custom_call.1} parent=19 // pred_check_branch
          %344 = sbr.rel (%p342) target = $region44
        $region43: #{tpu_custom_call.1} parent=19 // pred_region
          %p345 = scmp.lt.s32.totalorder %s26, 3
          %s346 = scalar_select %p345, %s26, 3
          %s347 = smul.addr %s346, 4
          %s348 = smul.addr %s347, 4
          %s349 = scalar_lea.vmem %s5, %s348
        $region44: #{tpu_custom_call.1} parent=19 // pred_fallthru
          _
        // Predicated region
        $region45: #{tpu_custom_call.1} parent=19 // pred_check
          %p350 = pneg %p206
        $region46: #{tpu_custom_call.1} parent=19 // pred_check_branch
          %352 = sbr.rel (%p350) target = $region48
        $region47: #{tpu_custom_call.1} parent=19 // pred_region
          %p353 = scmp.lt.s32.totalorder %s26, 3
          %s354 = scalar_select %p353, %s26, 3
          %s355 = scalar_lea.vmem %s6, %s354
        $region48: #{tpu_custom_call.1} parent=19 // pred_fallthru
          _
        // Predicated region
        $region49: #{tpu_custom_call.1} parent=19 // pred_check
          %p356 = pneg %p232
        $region50: #{tpu_custom_call.1} parent=19 // pred_check_branch
          %358 = sbr.rel (%p356) target = $region52
        $region51: #{tpu_custom_call.1} parent=19 // pred_region
          %p359 = scmp.lt.s32.totalorder %s26, 3
          %s360 = scalar_select %p359, %s26, 3
          %s361 = smul.addr %s360, 4
          %s362 = scalar_lea.vmem %s7, %s361
        $region52: #{tpu_custom_call.1} parent=19 // pred_fallthru
          _
      $region20: #{tpu_custom_call.1} parent=5 // pred_fallthru
        _
      %p363 = scmp.le.s32.totalorder 1, %s18
      %p364 = scmp.lt.s32.totalorder %s18, 9
      %p365 = pnand %p363, %p364
      %p366 = pneg %p365
      // Predicated region
      $region53: #{tpu_custom_call.1} parent=5 // pred_check
        _
      $region54: #{tpu_custom_call.1} parent=5 // pred_check_branch
        %368 = sbr.rel (%p365) target = $region56
      $region55: #{tpu_custom_call.1} parent=5 // pred_region
        %s369 = ssub.s32 %s18, 1
        %p370 = scmp.lt.s32.totalorder %s27, 1
        %s371 = scalar_select %p370, %s27, 1
        %s372 = smul.addr %s371, 4
        %s373 = scalar_lea.vmem %s0, %s372
        %p374 = pneg %p56
        %p375 = pneg %p53
        %p376 = scmp.lt.s32.totalorder %s28, 3
        %s377 = scalar_select %p376, %s28, 3
        %s378 = smul.addr %s377, 4
        %s379 = smul.addr %s378, 4
        %s380 = scalar_lea.vmem %s1, %s379
        %p381 = pneg %p82
        %p382 = pneg %p79
        %p383 = scmp.lt.s32.totalorder %s28, 3
        %s384 = scalar_select %p383, %s28, 3
        %s385 = scalar_lea.vmem %s2, %s384
        %p386 = pneg %p108
        %p387 = pneg %p105
        %p388 = scmp.lt.s32.totalorder %s28, 3
        %s389 = scalar_select %p388, %s28, 3
        %s390 = smul.addr %s389, 4
        %s391 = smul.addr %s390, 4
        %s392 = scalar_lea.vmem %s3, %s391
        %p393 = pneg %p134
        %p394 = pneg %p131
        %p395 = scmp.lt.s32.totalorder %s28, 3
        %s396 = scalar_select %p395, %s28, 3
        %s397 = scalar_lea.vmem %s4, %s396
        %p398 = pneg %p160
        %p399 = pneg %p157
        %p400 = scmp.lt.s32.totalorder %s28, 3
        %s401 = scalar_select %p400, %s28, 3
        %s402 = smul.addr %s401, 4
        %s403 = smul.addr %s402, 4
        %s404 = scalar_lea.vmem %s5, %s403
        %p405 = pneg %p186
        %p406 = pneg %p183
        %p407 = scmp.lt.s32.totalorder %s28, 3
        %s408 = scalar_select %p407, %s28, 3
        %s409 = scalar_lea.vmem %s6, %s408
        %p410 = pneg %p212
        %p411 = pneg %p209
        %p412 = scmp.lt.s32.totalorder %s28, 3
        %s413 = scalar_select %p412, %s28, 3
        %s414 = smul.addr %s413, 4
        %s415 = scalar_lea.vmem %s7, %s414
        %p416 = pneg %p238
        %p417 = pneg %p235
        %p418 = pneg %p259
        %p419 = pneg %p256
        %p420 = pneg %p285
        %p421 = pneg %p282
        %s422 = sand.u32 %s272, 1
        %s423 = scalar_lea.sflag [#allocation4], %s422
        %s424 = sand.u32 %s272, 1
        %s425 = smul.addr %s424, 8
        %s426 = scalar_lea.vmem [#allocation3], %s425
        %p427 = scmp.lt.s32.totalorder %s27, 1
        %s428 = scalar_select %p427, %s27, 1
        %s429 = smul.addr %s428, 4
        %s430 = scalar_lea.vmem %s0, %s429
        %p431 = scmp.lt.s32.totalorder %s28, 3
        %s432 = scalar_select %p431, %s28, 3
        %s433 = smul.addr %s432, 4
        %s434 = smul.addr %s433, 4
        %s435 = scalar_lea.vmem %s1, %s434
        %p436 = scmp.lt.s32.totalorder %s28, 3
        %s437 = scalar_select %p436, %s28, 3
        %s438 = scalar_lea.vmem %s2, %s437
        %p439 = scmp.lt.s32.totalorder %s28, 3
        %s440 = scalar_select %p439, %s28, 3
        %s441 = smul.addr %s440, 4
        %s442 = smul.addr %s441, 4
        %s443 = scalar_lea.vmem %s3, %s442
        %p444 = scmp.lt.s32.totalorder %s28, 3
        %s445 = scalar_select %p444, %s28, 3
        %s446 = scalar_lea.vmem %s4, %s445
        %p447 = scmp.lt.s32.totalorder %s28, 3
        %s448 = scalar_select %p447, %s28, 3
        %s449 = smul.addr %s448, 4
        %s450 = smul.addr %s449, 4
        %s451 = scalar_lea.vmem %s5, %s450
        %p452 = scmp.lt.s32.totalorder %s28, 3
        %s453 = scalar_select %p452, %s28, 3
        %s454 = scalar_lea.vmem %s6, %s453
        %p455 = scmp.lt.s32.totalorder %s28, 3
        %s456 = scalar_select %p455, %s28, 3
        %s457 = smul.addr %s456, 4
        %s458 = scalar_lea.vmem %s7, %s457
        %p460 = scmp.eq.s32.totalorder %s28, 0
        // Predicated region
        $region57: #{tpu_custom_call.1} parent=55 // pred_check
          %p461 = pneg %p460
        $region58: #{tpu_custom_call.1} parent=55 // pred_check_branch
          %463 = sbr.rel (%p461) target = $region60
        $region59: #{tpu_custom_call.1} parent=55 // pred_region
          %vm464 = vcmask 261120
          %465 = vst.msk [vmem:[#allocation2] sm:$0xff] %vm464, 0.0
        $region60: #{tpu_custom_call.1} parent=55 // pred_fallthru
          _
        %v466 = vld [vmem:[%s430] sm:$0xf]
        %v467 = vld [vmem:[%s435] sm:$0xf]
        %v468 = vld [vmem:[%s435 + $0x4] sm:$0xf]
        %v469 = vld [vmem:[%s435 + $0x8] sm:$0xf]
        %v470 = vld [vmem:[%s435 + $0xc] sm:$0xf]
        %v471 = vld [vmem:[%s438] sm:$0x1]
        %v473 = vlaneseq
        %v474 = vshrl.u32 %v473, 7
        %v475 = vsub.s32 0, %v474
        %v476 = vrot.slane %v471, %v475
        %v482 = vunpack.c.l.b16 %v467
        %v483 = vunpack.c.l.b16 %v468
        %v484 = vunpack.c.l.b16 %v469
        %v485 = vunpack.c.l.b16 %v470
        %v486 = vpack.c.b16 %v483, %v482
        %v487 = vpack.c.b16 %v485, %v484
        %vm490 = vcmask 261120
        %v492 = vsel %vm490, %v466, 0
        %494 = vmatprep.subr.bf16.mxu0 0
        %495 = vmatpush1.bf16.msra.mxu0 %v486
        %496 = vmatprep.subr.bf16.mxu0 0
        %497 = vmatpush1.bf16.msra.mxu0 %v487
        %498 = vmatprep.subr.bf16.mxu0 0
        %499 = vmatpush1.bf16.msra.mxu0 0
        %500 = vmatprep.subr.bf16.mxu0 0
        %501 = vmatpush1.bf16.msra.mxu0 0
        %502 = vmatprep.subr.bf16.mxu0 0
        %503 = vmatpush1.bf16.msra.mxu0 0
        %504 = vmatprep.subr.bf16.mxu0 0
        %505 = vmatpush1.bf16.msra.mxu0 0
        %506 = vmatprep.subr.bf16.mxu0 0
        %507 = vmatpush1.bf16.msra.mxu0 0
        %508 = vmatprep.subr.bf16.mxu0 0
        %509 = vmatpush1.bf16.msra.mxu0 0
        %510 = vmatprep.subr.bf16.mxu0 0
        %511 = vmatpush1.bf16.msra.mxu0 0
        %512 = vmatprep.subr.bf16.mxu0 0
        %513 = vmatpush1.bf16.msra.mxu0 0
        %514 = vmatprep.subr.bf16.mxu0 0
        %515 = vmatpush1.bf16.msra.mxu0 0
        %516 = vmatprep.subr.bf16.mxu0 0
        %517 = vmatpush1.bf16.msra.mxu0 0
        %518 = vmatprep.subr.bf16.mxu0 0
        %519 = vmatpush1.bf16.msra.mxu0 0
        %520 = vmatprep.subr.bf16.mxu0 0
        %521 = vmatpush1.bf16.msra.mxu0 0
        %522 = vmatprep.subr.bf16.mxu0 0
        %523 = vmatpush1.bf16.msra.mxu0 0
        %524 = vmatprep.subr.bf16.mxu0 0
        %525 = vmatpush1.bf16.msra.mxu0 0
        %526 = vmatprep.mubr.bf16.mxu0 0
        %527 = vmatmul.mubr.bf16.gmra.mrb[0].mxu0 %v492
        %v528 = vpop.f32.mrb[0].mxu0
        %v529 = vadd.f32 %v476, %v528
        %v530 = vpop.f32.mrb[0].mxu0
        %v531 = vpop.f32.mrb[0].mxu0
        %v532 = vpop.f32.mrb[0].mxu0
        %533 = vdwg.mxu0
        %v534 = vld [vmem:[%s443] sm:$0xf]
        %v535 = vld [vmem:[%s443 + $0x4] sm:$0xf]
        %v536 = vld [vmem:[%s443 + $0x8] sm:$0xf]
        %v537 = vld [vmem:[%s443 + $0xc] sm:$0xf]
        %v538 = vld [vmem:[%s446] sm:$0x1]
        %v540 = vlaneseq
        %v541 = vshrl.u32 %v540, 7
        %v542 = vsub.s32 0, %v541
        %v543 = vrot.slane %v538, %v542
        %v549 = vunpack.c.l.b16 %v534
        %v550 = vunpack.c.l.b16 %v535
        %v551 = vunpack.c.l.b16 %v536
        %v552 = vunpack.c.l.b16 %v537
        %v553 = vpack.c.b16 %v550, %v549
        %v554 = vpack.c.b16 %v552, %v551
        %557 = vmatprep.subr.bf16.mxu0 0
        %558 = vmatpush1.bf16.msra.mxu0 %v553
        %559 = vmatprep.subr.bf16.mxu0 0
        %560 = vmatpush1.bf16.msra.mxu0 %v554
        %561 = vmatprep.subr.bf16.mxu0 0
        %562 = vmatpush1.bf16.msra.mxu0 0
        %563 = vmatprep.subr.bf16.mxu0 0
        %564 = vmatpush1.bf16.msra.mxu0 0
        %565 = vmatprep.subr.bf16.mxu0 0
        %566 = vmatpush1.bf16.msra.mxu0 0
        %567 = vmatprep.subr.bf16.mxu0 0
        %568 = vmatpush1.bf16.msra.mxu0 0
        %569 = vmatprep.subr.bf16.mxu0 0
        %570 = vmatpush1.bf16.msra.mxu0 0
        %571 = vmatprep.subr.bf16.mxu0 0
        %572 = vmatpush1.bf16.msra.mxu0 0
        %573 = vmatprep.subr.bf16.mxu0 0
        %574 = vmatpush1.bf16.msra.mxu0 0
        %575 = vmatprep.subr.bf16.mxu0 0
        %576 = vmatpush1.bf16.msra.mxu0 0
        %577 = vmatprep.subr.bf16.mxu0 0
        %578 = vmatpush1.bf16.msra.mxu0 0
        %579 = vmatprep.subr.bf16.mxu0 0
        %580 = vmatpush1.bf16.msra.mxu0 0
        %581 = vmatprep.subr.bf16.mxu0 0
        %582 = vmatpush1.bf16.msra.mxu0 0
        %583 = vmatprep.subr.bf16.mxu0 0
        %584 = vmatpush1.bf16.msra.mxu0 0
        %585 = vmatprep.subr.bf16.mxu0 0
        %586 = vmatpush1.bf16.msra.mxu0 0
        %587 = vmatprep.subr.bf16.mxu0 0
        %588 = vmatpush1.bf16.msra.mxu0 0
        %589 = vmatprep.mubr.bf16.mxu0 0
        %590 = vmatmul.mubr.bf16.gmra.mrb[0].mxu0 %v492
        %v591 = vpop.f32.mrb[0].mxu0
        %v592 = vadd.f32 %v543, %v591
        %v593 = vpop.f32.mrb[0].mxu0
        %v594 = vpop.f32.mrb[0].mxu0
        %v595 = vpop.f32.mrb[0].mxu0
        %596 = vdwg.mxu0
        %v597 = vld [vmem:[%s451] sm:$0xf]
        %v598 = vld [vmem:[%s451 + $0x4] sm:$0xf]
        %v599 = vld [vmem:[%s451 + $0x8] sm:$0xf]
        %v600 = vld [vmem:[%s451 + $0xc] sm:$0xf]
        %v601 = vld [vmem:[%s454] sm:$0x1]
        %v603 = vlaneseq
        %v604 = vshrl.u32 %v603, 7
        %v605 = vsub.s32 0, %v604
        %v606 = vrot.slane %v601, %v605
        %v612 = vunpack.c.l.b16 %v597
        %v613 = vunpack.c.l.b16 %v598
        %v614 = vunpack.c.l.b16 %v599
        %v615 = vunpack.c.l.b16 %v600
        %v616 = vpack.c.b16 %v613, %v612
        %v617 = vpack.c.b16 %v615, %v614
        %620 = vmatprep.subr.bf16.mxu0 0
        %621 = vmatpush1.bf16.msra.mxu0 %v616
        %622 = vmatprep.subr.bf16.mxu0 0
        %623 = vmatpush1.bf16.msra.mxu0 %v617
        %624 = vmatprep.subr.bf16.mxu0 0
        %625 = vmatpush1.bf16.msra.mxu0 0
        %626 = vmatprep.subr.bf16.mxu0 0
        %627 = vmatpush1.bf16.msra.mxu0 0
        %628 = vmatprep.subr.bf16.mxu0 0
        %629 = vmatpush1.bf16.msra.mxu0 0
        %630 = vmatprep.subr.bf16.mxu0 0
        %631 = vmatpush1.bf16.msra.mxu0 0
        %632 = vmatprep.subr.bf16.mxu0 0
        %633 = vmatpush1.bf16.msra.mxu0 0
        %634 = vmatprep.subr.bf16.mxu0 0
        %635 = vmatpush1.bf16.msra.mxu0 0
        %636 = vmatprep.subr.bf16.mxu0 0
        %637 = vmatpush1.bf16.msra.mxu0 0
        %638 = vmatprep.subr.bf16.mxu0 0
        %639 = vmatpush1.bf16.msra.mxu0 0
        %640 = vmatprep.subr.bf16.mxu0 0
        %641 = vmatpush1.bf16.msra.mxu0 0
        %642 = vmatprep.subr.bf16.mxu0 0
        %643 = vmatpush1.bf16.msra.mxu0 0
        %644 = vmatprep.subr.bf16.mxu0 0
        %645 = vmatpush1.bf16.msra.mxu0 0
        %646 = vmatprep.subr.bf16.mxu0 0
        %647 = vmatpush1.bf16.msra.mxu0 0
        %648 = vmatprep.subr.bf16.mxu0 0
        %649 = vmatpush1.bf16.msra.mxu0 0
        %650 = vmatprep.subr.bf16.mxu0 0
        %651 = vmatpush1.bf16.msra.mxu0 0
        %652 = vmatprep.mubr.bf16.mxu0 0
        %653 = vmatmul.mubr.bf16.gmra.mrb[0].mxu0 %v492
        %v654 = vpop.f32.mrb[0].mxu0
        %v655 = vadd.f32 %v606, %v654
        %v656 = vpop.f32.mrb[0].mxu0
        %v657 = vpop.f32.mrb[0].mxu0
        %v658 = vpop.f32.mrb[0].mxu0
        %659 = vdwg.mxu0
        %v660 = vmul.f32 %v529, 0.35355338
        %v661 = vpack.c.bf16 %v660, %v660
        %v662 = vpack.c.bf16 %v592, %v592
        %v663 = vpack.c.bf16 %v655, %v655
        %vm664 = vcmask 64512
        %v666 = vsel %vm664, %v661, 0
        %v669 = vsel %vm664, %v662, 0
        %671 = vmatprep.subr.bf16.mxu0 0
        %672 = vmatpush1.bf16.xpose.msra.mxu0 %v669
        %673 = vmatprep.subr.bf16.mxu0 0
        %674 = vmatpush1.bf16.xpose.msra.mxu0 0
        %675 = vmatprep.subr.bf16.mxu0 0
        %676 = vmatpush1.bf16.xpose.msra.mxu0 0
        %677 = vmatprep.subr.bf16.mxu0 0
        %678 = vmatpush1.bf16.xpose.msra.mxu0 0
        %679 = vmatprep.subr.bf16.mxu0 0
        %680 = vmatpush1.bf16.xpose.msra.mxu0 0
        %681 = vmatprep.subr.bf16.mxu0 0
        %682 = vmatpush1.bf16.xpose.msra.mxu0 0
        %683 = vmatprep.subr.bf16.mxu0 0
        %684 = vmatpush1.bf16.xpose.msra.mxu0 0
        %685 = vmatprep.subr.bf16.mxu0 0
        %686 = vmatpush1.bf16.xpose.msra.mxu0 0
        %687 = vmatprep.subr.bf16.mxu0 0
        %688 = vmatpush1.bf16.xpose.msra.mxu0 0
        %689 = vmatprep.subr.bf16.mxu0 0
        %690 = vmatpush1.bf16.xpose.msra.mxu0 0
        %691 = vmatprep.subr.bf16.mxu0 0
        %692 = vmatpush1.bf16.xpose.msra.mxu0 0
        %693 = vmatprep.subr.bf16.mxu0 0
        %694 = vmatpush1.bf16.xpose.msra.mxu0 0
        %695 = vmatprep.subr.bf16.mxu0 0
        %696 = vmatpush1.bf16.xpose.msra.mxu0 0
        %697 = vmatprep.subr.bf16.mxu0 0
        %698 = vmatpush1.bf16.xpose.msra.mxu0 0
        %699 = vmatprep.subr.bf16.mxu0 0
        %700 = vmatpush1.bf16.xpose.msra.mxu0 0
        %701 = vmatprep.subr.bf16.mxu0 0
        %702 = vmatpush1.bf16.xpose.msra.mxu0 0
        %703 = vmatprep.mubr.bf16.mxu0 0
        %704 = vmatmul.mubr.bf16.gmra.mrb[0].mxu0 %v666
        %v705 = vpop.f32.mrb[0].mxu0
        %v706 = vadd.f32 0.0, %v705
        %v707 = vpop.f32.mrb[0].mxu0
        %v708 = vpop.f32.mrb[0].mxu0
        %v709 = vpop.f32.mrb[0].mxu0
        %710 = vdwg.mxu0
        %v711 = vsel %vm664, %v706, -inf
        %712 = vmax.xlane.f32.xlu0 %v711
        %v713 = vpop.xlane.xlu0 %712
        %v714 = vsub.f32 %v706, %v713
        %v715 = vmul.f32 %v714, 1.442695
        %v716 = vpow.pop %v715
        %v717 = vsel %vm664, %v716, 0.0
        %718 = vadd.xlane.f32.xlu0 %v717
        %v719 = vpop.xlane.xlu0 %718
        %v720 = vrcp.pop %v719
        %v721 = vmul.f32 %v716, %v720
        %v722 = vpack.c.bf16 %v721, %v721
        %v724 = vsel %vm664, %v722, 0
        %vm726 = vcmask 1043456
        %v728 = vsel %vm726, %v663, 0
        %730 = vmatprep.subr.bf16.mxu0 0
        %731 = vmatpush1.bf16.msra.mxu0 %v728
        %732 = vmatprep.subr.bf16.mxu0 0
        %733 = vmatpush1.bf16.msra.mxu0 0
        %734 = vmatprep.subr.bf16.mxu0 0
        %735 = vmatpush1.bf16.msra.mxu0 0
        %736 = vmatprep.subr.bf16.mxu0 0
        %737 = vmatpush1.bf16.msra.mxu0 0
        %738 = vmatprep.subr.bf16.mxu0 0
        %739 = vmatpush1.bf16.msra.mxu0 0
        %740 = vmatprep.subr.bf16.mxu0 0
        %741 = vmatpush1.bf16.msra.mxu0 0
        %742 = vmatprep.subr.bf16.mxu0 0
        %743 = vmatpush1.bf16.msra.mxu0 0
        %744 = vmatprep.subr.bf16.mxu0 0
        %745 = vmatpush1.bf16.msra.mxu0 0
        %746 = vmatprep.subr.bf16.mxu0 0
        %747 = vmatpush1.bf16.msra.mxu0 0
        %748 = vmatprep.subr.bf16.mxu0 0
        %749 = vmatpush1.bf16.msra.mxu0 0
        %750 = vmatprep.subr.bf16.mxu0 0
        %751 = vmatpush1.bf16.msra.mxu0 0
        %752 = vmatprep.subr.bf16.mxu0 0
        %753 = vmatpush1.bf16.msra.mxu0 0
        %754 = vmatprep.subr.bf16.mxu0 0
        %755 = vmatpush1.bf16.msra.mxu0 0
        %756 = vmatprep.subr.bf16.mxu0 0
        %757 = vmatpush1.bf16.msra.mxu0 0
        %758 = vmatprep.subr.bf16.mxu0 0
        %759 = vmatpush1.bf16.msra.mxu0 0
        %760 = vmatprep.subr.bf16.mxu0 0
        %761 = vmatpush1.bf16.msra.mxu0 0
        %762 = vmatprep.mubr.bf16.mxu0 0
        %763 = vmatmul.mubr.bf16.gmra.mrb[0].mxu0 %v724
        %v764 = vpop.f32.mrb[0].mxu0
        %v765 = vadd.f32 0.0, %v764
        %v766 = vpop.f32.mrb[0].mxu0
        %v767 = vpop.f32.mrb[0].mxu0
        %v768 = vpop.f32.mrb[0].mxu0
        %769 = vdwg.mxu0
        %v770 = vpack.c.bf16 %v765, %v765
        %v771 = vld [vmem:[#allocation2] sm:$0xff]
        %v772 = vld [vmem:[%s458] sm:$0xf]
        %v774 = vsel %vm664, %v770, 0
        %v777 = vsel %vm726, %v772, 0
        %779 = vmatprep.subr.bf16.mxu0 0
        %780 = vmatpush1.bf16.msra.mxu0 %v777
        %781 = vmatprep.subr.bf16.mxu0 0
        %782 = vmatpush1.bf16.msra.mxu0 0
        %783 = vmatprep.subr.bf16.mxu0 0
        %784 = vmatpush1.bf16.msra.mxu0 0
        %785 = vmatprep.subr.bf16.mxu0 0
        %786 = vmatpush1.bf16.msra.mxu0 0
        %787 = vmatprep.subr.bf16.mxu0 0
        %788 = vmatpush1.bf16.msra.mxu0 0
        %789 = vmatprep.subr.bf16.mxu0 0
        %790 = vmatpush1.bf16.msra.mxu0 0
        %791 = vmatprep.subr.bf16.mxu0 0
        %792 = vmatpush1.bf16.msra.mxu0 0
        %793 = vmatprep.subr.bf16.mxu0 0
        %794 = vmatpush1.bf16.msra.mxu0 0
        %795 = vmatprep.subr.bf16.mxu0 0
        %796 = vmatpush1.bf16.msra.mxu0 0
        %797 = vmatprep.subr.bf16.mxu0 0
        %798 = vmatpush1.bf16.msra.mxu0 0
        %799 = vmatprep.subr.bf16.mxu0 0
        %800 = vmatpush1.bf16.msra.mxu0 0
        %801 = vmatprep.subr.bf16.mxu0 0
        %802 = vmatpush1.bf16.msra.mxu0 0
        %803 = vmatprep.subr.bf16.mxu0 0
        %804 = vmatpush1.bf16.msra.mxu0 0
        %805 = vmatprep.subr.bf16.mxu0 0
        %806 = vmatpush1.bf16.msra.mxu0 0
        %807 = vmatprep.subr.bf16.mxu0 0
        %808 = vmatpush1.bf16.msra.mxu0 0
        %809 = vmatprep.subr.bf16.mxu0 0
        %810 = vmatpush1.bf16.msra.mxu0 0
        %811 = vmatprep.mubr.bf16.mxu0 0
        %812 = vmatmul.mubr.bf16.gmra.mrb[0].mxu0 %v774
        %v813 = vpop.f32.mrb[0].mxu0
        %v814 = vadd.f32 0.0, %v813
        %v815 = vpop.f32.mrb[0].mxu0
        %v816 = vpop.f32.mrb[0].mxu0
        %v817 = vpop.f32.mrb[0].mxu0
        %818 = vdwg.mxu0
        %v819 = vadd.f32 %v771, %v814
        %820 = vst.msk [vmem:[#allocation2] sm:$0xff] %vm490, %v819
        %p821 = scmp.eq.s32.totalorder %s28, 3
        // Predicated region
        $region61: #{tpu_custom_call.1} parent=55 // pred_check
          %p822 = pneg %p821
        $region62: #{tpu_custom_call.1} parent=55 // pred_check_branch
          %824 = sbr.rel (%p822) target = $region64
        $region63: #{tpu_custom_call.1} parent=55 // pred_region
          %v825 = vld [vmem:[#allocation2] sm:$0xff]
          %v826 = vld [vmem:[%s8] sm:$0x1]
          %v828 = vlaneseq
          %v829 = vshrl.u32 %v828, 7
          %v830 = vsub.s32 0, %v829
          %v831 = vrot.slane %v826, %v830
          %v833 = vadd.f32 %v825, %v831
          %834 = vst.msk [vmem:[%s426] sm:$0xff] %vm490, %v833
        $region64: #{tpu_custom_call.1} parent=55 // pred_fallthru
          _
        %s835 = sand.u32 %s272, 1
        %s836 = scalar_lea.sflag [#allocation4], %s835
        %s837 = sand.u32 %s272, 1
        %s838 = smul.addr %s837, 8
        %s839 = scalar_lea.vmem [#allocation3], %s838
        // Predicated region
        $region65: #{tpu_custom_call.1} parent=55 // pred_check
          %p840 = pneg %p282
        $region66: #{tpu_custom_call.1} parent=55 // pred_check_branch
          %842 = sbr.rel (%p840) target = $region68
        $region67: #{tpu_custom_call.1} parent=55 // pred_region
          %s844 = ssub.s32 128, 128
          %845 = vsyncadd %s836, %s844
          %s846 = smul.addr %s27, 128
          %s847 = scalar_lea.hbm %s9, %s846
          %s849 = sshll.u32 %s839, 4
          %s850 = int_to_ptr.vmem [resolvable:$true] %s849
          %852 = dma.vmem_to_hbm [thread:$0]  %s850, 128, %s847, %s836
        $region68: #{tpu_custom_call.1} parent=55 // pred_fallthru
          _
      $region56: #{tpu_custom_call.1} parent=5 // pred_fallthru
        _
      %p853 = scmp.le.s32.totalorder 2, %s18
      // Predicated region
      $region69: #{tpu_custom_call.1} parent=5 // pred_check
        %p854 = pneg %p853
      $region70: #{tpu_custom_call.1} parent=5 // pred_check_branch
        %856 = sbr.rel (%p854) target = $region72
      $region71: #{tpu_custom_call.1} parent=5 // pred_region
        %s857 = ssub.s32 %s18, 2
        // Predicated region
        $region73: #{tpu_custom_call.1} parent=71 // pred_check
          %p858 = pneg %p288
        $region74: #{tpu_custom_call.1} parent=71 // pred_check_branch
          %860 = sbr.rel (%p858) target = $region76
        $region75: #{tpu_custom_call.1} parent=71 // pred_region
          %s861 = sand.u32 %s273, 1
          %s862 = scalar_lea.sflag [#allocation4], %s861
          %s863 = sand.u32 %s273, 1
          %s864 = smul.addr %s863, 8
          %s865 = scalar_lea.vmem [#allocation3], %s864
          %866 = dma.done %s862, 128
        $region76: #{tpu_custom_call.1} parent=71 // pred_fallthru
          _
      $region72: #{tpu_custom_call.1} parent=5 // pred_fallthru
        _
    $region6: #{tpu_custom_call.1} parent=1 // loop_footer
      %s22 = sadd.s32 1, %s18
    $region7: #{tpu_custom_call.1} parent=1 // loop_footer_branch
      %17 = sbr.rel target = $region3
    $region8: #{tpu_custom_call.1} parent=1 // loop_exit
      _
    %867 = vsyncpa [#allocation4], 1
    %s868 = scalar_lea.sflag [#allocation4], 1
    %869 = vsyncpa %s868, 1

</llo_original>
